<compile_context>
chip_gen: v7x
topology: tpu7x:2x2x1
jax: 0.10.0
libtpu: 0.0.40
codegen_flags: <defaults>
</compile_context>

<pallas_src>
import functools

import jax
import jax.numpy as jnp
import numpy as np
from jax.experimental import pallas as pl
from jax.experimental.pallas import tpu as pltpu

_EPS = 1e-5
_MASK = 1e30          # segment-padding sentinel (never a real squared distance)


def _round_up(v, m):
    return ((v + m - 1) // m) * m


def _pick_tile(total, candidates=(1024, 512, 256, 128)):
    for t in candidates:
        if total % t == 0:
            return t
    return total


# ----------------------------------------------------------------------------
# Stage 1: UnaryBlockPXO = Linear(no bias) + BatchNorm1d(eval, folded) + ReLU
# ----------------------------------------------------------------------------
def _enc_kernel(x_ref, w_ref, b_ref, out_ref):
    y = jnp.dot(x_ref[...], w_ref[...], preferred_element_type=jnp.float32)
    out_ref[...] = jnp.maximum(y + b_ref[...], 0.0).astype(out_ref.dtype)


# ----------------------------------------------------------------------------
# Stage 2: segment-windowed multi-scale kNN mean pooling + channel concat
# ----------------------------------------------------------------------------
def _mssca_kernel(scales, mm_dtype, tiles_per_seg,
                  seglen_ref,                 # scalar prefetch (SMEM): (B,) int32
                  pq_ref,                     # (tile_n, 8)       f32  query coords
                  xq_ref,                     # (tile_n, C)       bf16 query feats
                  gpT_ref,                    # (8, seg_pad)      f32  segment coords^T
                  gx_ref,                     # (seg_pad, C)      bf16 segment feats
                  out_ref,                    # (tile_n, (1+S)*C) f32
                  d_ref):                     # (tile_n, seg_pad) f32 scratch
    tn = pq_ref.shape[0]
    m = gpT_ref.shape[1]

    seg = pl.program_id(0) // tiles_per_seg
    seg_len = seglen_ref[seg]

    # squared distances, element-wise per coordinate (bit-matches the reference)
    dx = pq_ref[:, 0:1] - gpT_ref[0:1, :]
    dy = pq_ref[:, 1:2] - gpT_ref[1:2, :]
    dz = pq_ref[:, 2:3] - gpT_ref[2:3, :]
    d = dx * dx + dy * dy + dz * dz

    # mask the segment's padding rows (gallery is already this segment only)
    g_local = jax.lax.broadcasted_iota(jnp.int32, (1, m), 1)
    d_ref[...] = jnp.where(g_local < seg_len, d, jnp.float32(_MASK))

    # one nearest-neighbour pick per iteration: lowest index wins exact ties,
    # the chosen entry is marked +inf in-place (distinct from the 1e30 mask).
    def select_one(_, carry):
        dcur = d_ref[...]
        dmin = jnp.min(dcur, axis=-1, keepdims=True)
        lane = jax.lax.broadcasted_iota(jnp.int32, (tn, m), 1)
        cand = jnp.where(dcur == dmin, lane, jnp.int32(m))
        idx = jnp.min(cand, axis=-1, keepdims=True)
        d_ref[...] = jnp.where(lane == idx, jnp.float32(jnp.inf), dcur)
        return carry

    one = jnp.array(1, mm_dtype)
    zero = jnp.array(0, mm_dtype)
    gx = gx_ref[...].astype(mm_dtype)

    # nested scales: grow one implicit selection set (8, then +8, then +16),
    # snapshot the mean at each k with a single 0/1-matrix @ features matmul.
    means = {}
    prev = 0
    for k in sorted(scales):
        jax.lax.fori_loop(0, k - prev, select_one, 0, unroll=True)
        sel = jnp.where(d_ref[...] == jnp.inf, one, zero)   # exact 0/1 in bf16
        means[k] = jnp.dot(sel, gx, preferred_element_type=jnp.float32) \
            * jnp.float32(1.0 / k)                          # 1/k power of two -> exact
        prev = k

    # lane-dense (tile_n, (1+len(scales))*C) store
    out_ref[...] = jnp.concatenate(
        [xq_ref[...].astype(jnp.float32)] + [means[k] for k in scales], axis=-1)


# ----------------------------------------------------------------------------
# Params / wrapper
# ----------------------------------------------------------------------------
def init_params(key, in_planes, out_planes):
    """UnaryBlockPXO params: Linear(in, out, bias=False) + BatchNorm1d(out)."""
    k0, k1, k2, k3, k4 = jax.random.split(key, 5)
    return dict(
        wT=0.1 * jax.random.normal(k0, (in_planes, out_planes), jnp.float32),
        gamma=1.0 + 0.1 * jax.random.normal(k1, (out_planes,), jnp.float32),
        beta=0.1 * jax.random.normal(k2, (out_planes,), jnp.float32),
        rmean=0.1 * jax.random.normal(k3, (out_planes,), jnp.float32),
        rvar=jax.random.uniform(k4, (out_planes,), jnp.float32,
                                minval=0.5, maxval=1.5),
    )


def _fused_linear_bn(params):
    scale = params["gamma"] / jnp.sqrt(params["rvar"] + _EPS)
    w_fused = params["wT"] * scale[None, :]                          # (Cin, C)
    b_fused = (params["beta"] - params["rmean"] * scale)[None, :]    # (1, C)
    return w_fused, b_fused


def mssca_forward(params, pxo, spatial=(8, 16, 32), tile_n=256,
                  mm_dtype=jnp.bfloat16):
    p, x, o = pxo
    n, cin = x.shape
    c = params["wT"].shape[1]
    scales = tuple(int(s) for s in spatial)
    c_out = c * (1 + len(scales))
    assert tile_n % 128 == 0

    # ---- host-side segment layout -------------------------------------------
    o_np = np.asarray(o, dtype=np.int64)
    assert o_np[-1] == n, "offsets must be cumulative segment ends summing to n"
    seg_starts = np.concatenate([np.zeros(1, np.int64), o_np[:-1]])
    seg_sizes = o_np - seg_starts
    assert seg_sizes.min() >= max(scales), \
        "each batch segment needs at least max(spatial) points"
    nb = int(o_np.shape[0])

    seg_pad = int(_round_up(int(seg_sizes.max()), tile_n))
    tiles_per_seg = seg_pad // tile_n
    total = nb * seg_pad

    # scatter points into equal, tile-aligned segment slots (pad rows -> dummy n)
    rows = np.arange(total, dtype=np.int64)
    seg_of_row = rows // seg_pad
    local = rows % seg_pad
    src = jnp.asarray(np.where(local < seg_sizes[seg_of_row],
                               seg_starts[seg_of_row] + local, n).astype(np.int32))

    p_ext = jnp.concatenate([p.astype(jnp.float32),
                             jnp.zeros((1, p.shape[1]), jnp.float32)], axis=0)
    x_ext = jnp.concatenate([x.astype(jnp.float32),
                             jnp.zeros((1, cin), jnp.float32)], axis=0)
    pq = jnp.pad(p_ext[src], ((0, 0), (0, 8 - p.shape[1])))   # (total, 8)
    xp = x_ext[src]                                            # (total, Cin)
    gpT = pq.T                                                 # (8, total)

    # inverse map: padded-slot row for every original point (to undo the packing)
    orig = np.arange(n, dtype=np.int64)
    seg_of_pt = np.searchsorted(o_np, orig, side="right")
    dst = jnp.asarray((seg_of_pt * seg_pad
                       + (orig - seg_starts[seg_of_pt])).astype(np.int32))

    seg_len = jnp.asarray(seg_sizes.astype(np.int32))          # (B,) scalar prefetch

    w_fused, b_fused = _fused_linear_bn(params)

    # ---- stage 1: UnaryBlockPXO = Linear(no bias) + BN(eval) + ReLU (bf16 out)
    tile_enc = _pick_tile(total)
    x_enc = pl.pallas_call(
        _enc_kernel,
        out_shape=jax.ShapeDtypeStruct((total, c), mm_dtype),
        grid=(total // tile_enc,),
        in_specs=[pl.BlockSpec((tile_enc, cin), lambda i: (i, 0)),
                  pl.BlockSpec((cin, c), lambda i: (0, 0)),
                  pl.BlockSpec((1, c), lambda i: (0, 0))],
        out_specs=pl.BlockSpec((tile_enc, c), lambda i: (i, 0)),
        compiler_params=pltpu.CompilerParams(
            dimension_semantics=("parallel",)),
    )(xp, w_fused, b_fused)

    # ---- stage 2: segment-windowed multi-scale kNN mean + channel concat ----
    dsz = jnp.dtype(mm_dtype).itemsize
    need = (tile_n * seg_pad * 4                 # distance scratch
            + 2 * (8 * seg_pad * 4)              # segment coords^T block (x2 bufs)
            + 2 * (seg_pad * c * dsz)            # segment feature block
            + 2 * (tile_n * 8 * 4)               # query coords block
            + 2 * (tile_n * c * dsz)             # query feature block
            + 2 * (tile_n * c_out * 4))          # output block
    vmem_limit = int(min(max(2 * need, 32 << 20), 56 << 20))  # v7x headroom cap

    out_packed = pl.pallas_call(
        functools.partial(_mssca_kernel, scales, mm_dtype, tiles_per_seg),
        out_shape=jax.ShapeDtypeStruct((total, c_out), jnp.float32),
        grid_spec=pltpu.PrefetchScalarGridSpec(
            num_scalar_prefetch=1,
            grid=(total // tile_n,),
            in_specs=[
                pl.BlockSpec((tile_n, 8), lambda i, sl: (i, 0)),          # query coords
                pl.BlockSpec((tile_n, c), lambda i, sl: (i, 0)),          # query feats
                pl.BlockSpec((8, seg_pad),
                             lambda i, sl: (0, i // tiles_per_seg)),      # own segment coords^T
                pl.BlockSpec((seg_pad, c),
                             lambda i, sl: (i // tiles_per_seg, 0)),      # own segment feats
            ],
            out_specs=pl.BlockSpec((tile_n, c_out), lambda i, sl: (i, 0)),
            scratch_shapes=[pltpu.VMEM((tile_n, seg_pad), jnp.float32)],  # distances
        ),
        compiler_params=pltpu.CompilerParams(
            dimension_semantics=("parallel",),
            vmem_limit_bytes=vmem_limit),
    )(seg_len, pq, x_enc, gpT, x_enc)

    return [p, out_packed[dst], o]


# ----------------------------------------------------------------------------
# Pure-JAX reference (mirrors MSSCA.forward with eval-mode BN)
# ----------------------------------------------------------------------------
def reference(params, pxo, spatial=(8, 16, 32)):
    p, x, o = pxo
    n = x.shape[0]
    scale = params["gamma"] / jnp.sqrt(params["rvar"] + _EPS)
    bias = params["beta"] - params["rmean"] * scale
    xe = jnp.maximum((x @ params["wT"]) * scale[None, :] + bias[None, :], 0.0)

    bid = (jnp.arange(n, dtype=jnp.int32)[:, None]
           >= o[None, :].astype(jnp.int32)).sum(axis=1).astype(jnp.int32)
    dx = p[:, None, 0] - p[None, :, 0]
    dy = p[:, None, 1] - p[None, :, 1]
    dz = p[:, None, 2] - p[None, :, 2]
    d = dx * dx + dy * dy + dz * dz
    d = jnp.where(bid[:, None] == bid[None, :], d, jnp.float32(_MASK))
    order = jnp.argsort(d, axis=1, stable=True)

    outs = [xe]
    for k in spatial:
        outs.append(jnp.mean(xe[order[:, :int(k)]], axis=1))
    return [p, jnp.concatenate(outs, axis=1), o]


# ----------------------------------------------------------------------------
if __name__ == "__main__":
    key = jax.random.PRNGKey(0)
    kp, kx, kw = jax.random.split(key, 3)

    n, in_planes, out_planes = 512, 16, 32
    spatial = (8, 16, 32)

    p = jax.random.normal(kp, (n, 3), jnp.float32)
    x = jax.random.normal(kx, (n, in_planes), jnp.float32)
    o = jnp.array([256, 512], jnp.int32)          # two batch segments of 256 points

    params = init_params(kw, in_planes, out_planes)

    p_out, feat, o_out = mssca_forward(params, (p, x, o), spatial=spatial,
                                       tile_n=256, mm_dtype=jnp.bfloat16)
    jax.block_until_ready(feat)

    _, feat_ref, _ = reference(params, (p, x, o), spatial=spatial)
    feat_np = np.asarray(feat)
    ref_np = np.asarray(feat_ref)
    assert feat_np.shape == (n, out_planes * (1 + len(spatial)))
    err = np.max(np.abs(feat_np - ref_np))
    assert np.allclose(feat_np, ref_np, atol=1e-2, rtol=1e-2), \
        f"kernel/reference mismatch, max abs err {err:.3e}"
    print("KERNEL_OK")
</pallas_src>

<mosaic_0001>
module attributes {stable_mosaic.version = 11 : i64} {
  func.func @_enc_kernel(%arg0: i32, %arg1: memref<512x16xf32, #tpu.memory_space<vmem>>, %arg2: memref<16x32xf32, #tpu.memory_space<vmem>>, %arg3: memref<1x32xf32, #tpu.memory_space<vmem>>, %arg4: memref<512x32xbf16, #tpu.memory_space<vmem>>) attributes {dimension_semantics = [#tpu.dimension_semantics<parallel>], iteration_bounds = array<i64: 1>, scalar_prefetch = 0 : i64, scratch_operands = 0 : i64, tpu.core_type = #tpu.core_type<tc>, window_params = [{transform_indices = @transform_0, window_bounds = array<i64: 512, 16>}, {pipeline_mode = #tpu.pipeline_mode<synchronous>, transform_indices = @transform_1, window_bounds = array<i64: 16, 32>}, {pipeline_mode = #tpu.pipeline_mode<synchronous>, transform_indices = @transform_2, window_bounds = array<i64: 1, 32>}, {transform_indices = @transform_3, window_bounds = array<i64: 512, 32>}]} {
    %c0 = arith.constant 0 : index
    %c0_0 = arith.constant 0 : index
    %0 = vector.load %arg1[%c0, %c0_0] : memref<512x16xf32, #tpu.memory_space<vmem>>, vector<512x16xf32>
    %c0_1 = arith.constant 0 : index
    %c0_2 = arith.constant 0 : index
    %1 = vector.load %arg2[%c0_1, %c0_2] : memref<16x32xf32, #tpu.memory_space<vmem>>, vector<16x32xf32>
    %cst = arith.constant dense<0.000000e+00> : vector<512x32xf32>
    %2 = tpu.matmul %0, %1, %cst {dimension_numbers = #tpu.dot_dimension_numbers<[1], [0], [0], [1], [0, 0, 1, 1], [], []>} : vector<512x16xf32>, vector<16x32xf32>, vector<512x32xf32> -> vector<512x32xf32>
    %c0_3 = arith.constant 0 : index
    %c0_4 = arith.constant 0 : index
    %3 = vector.load %arg3[%c0_3, %c0_4] : memref<1x32xf32, #tpu.memory_space<vmem>>, vector<1x32xf32>
    %4 = vector.broadcast %3 : vector<1x32xf32> to vector<512x32xf32>
    %5 = arith.addf %2, %4 : vector<512x32xf32>
    %cst_5 = arith.constant 0.000000e+00 : f32
    %6 = vector.broadcast %cst_5 : f32 to vector<512x32xf32>
    %7 = arith.maximumf %5, %6 : vector<512x32xf32>
    %8 = arith.truncf %7 : vector<512x32xf32> to vector<512x32xbf16>
    %c0_6 = arith.constant 0 : index
    %c0_7 = arith.constant 0 : index
    %9 = vector.load %arg4[%c0_6, %c0_7] : memref<512x32xbf16, #tpu.memory_space<vmem>>, vector<512x32xbf16>
    tpu.vector_store %arg4[%c0_6, %c0_7], %8 {strides = array<i32>} : memref<512x32xbf16, #tpu.memory_space<vmem>>, vector<512x32xbf16>,
    return
  }
  func.func @transform_0(%arg0: i32) -> (i32, i32) {
    %c0_i32 = arith.constant 0 : i32
    %c0_i32_0 = arith.constant 0 : i32
    return %arg0, %c0_i32 : i32, i32
  }
  func.func @transform_1(%arg0: i32) -> (i32, i32) {
    %c0_i32 = arith.constant 0 : i32
    %c0_i32_0 = arith.constant 0 : i32
    %c0_i32_1 = arith.constant 0 : i32
    return %c0_i32, %c0_i32_0 : i32, i32
  }
  func.func @transform_2(%arg0: i32) -> (i32, i32) {
    %c0_i32 = arith.constant 0 : i32
    %c0_i32_0 = arith.constant 0 : i32
    %c0_i32_1 = arith.constant 0 : i32
    return %c0_i32, %c0_i32_0 : i32, i32
  }
  func.func @transform_3(%arg0: i32) -> (i32, i32) {
    %c0_i32 = arith.constant 0 : i32
    %c0_i32_0 = arith.constant 0 : i32
    return %arg0, %c0_i32 : i32, i32
  }
}

</mosaic_0001>

<llo_original>
// kernel: tpu_custom_call.1
$region0: #{tpu_custom_call.1}
  #allocation0 [shape = 'u32[]', space=smem, size = 0x4, offset = 0x4, fixed_abs, tag = 'smem constant byte address 0x4 - core index']
  #allocation1 [shape = 'u32[144,128]{1,0:T(1,128)}', space=vmem, size = 0x12000, scoped, tag = 'internal scratch']
  %s0 = inlined_call_operand.vmem [shape: f32[512,16], index: 0, kind: input, shape index: {}]
  %s1 = inlined_call_operand.vmem [shape: f32[16,32], index: 1, kind: input, shape index: {}]
  %s2 = inlined_call_operand.vmem [shape: f32[1,32], index: 2, kind: input, shape index: {}]
  %s3 = inlined_call_operand.vmem [shape: bf16[512,32], index: 3, kind: output, shape index: {}]
  %s4 = sld [smem:[#allocation0]]
  $region22: #{tpu_custom_call.1} parent=0
    _
  %s6 = ssub.s32 1, %s4
  %s7 = scalar_select 0, %s6, %s4
  // Predicated region
  $region2: #{tpu_custom_call.1} parent=0 // pred_check
    _
  $region3: #{tpu_custom_call.1} parent=0 // pred_check_branch
    %9 = sbr.rel (0) target = $region5
  $region4: #{tpu_custom_call.1} parent=0 // pred_region
    _
  $region5: #{tpu_custom_call.1} parent=0 // pred_fallthru
    _
  // Predicated region
  $region6: #{tpu_custom_call.1} parent=0 // pred_check
    _
  $region7: #{tpu_custom_call.1} parent=0 // pred_check_branch
    %11 = sbr.rel (0) target = $region9
  $region8: #{tpu_custom_call.1} parent=0 // pred_region
    _
  $region9: #{tpu_custom_call.1} parent=0 // pred_fallthru
    _
  // Predicated region
  $region10: #{tpu_custom_call.1} parent=0 // pred_check
    _
  $region11: #{tpu_custom_call.1} parent=0 // pred_check_branch
    %13 = sbr.rel (0) target = $region13
  $region12: #{tpu_custom_call.1} parent=0 // pred_region
    _
  $region13: #{tpu_custom_call.1} parent=0 // pred_fallthru
    _
  %v14 = vld [vmem:[%s0] sm:$0xff]
  %v15 = vld [vmem:[%s0 + $0x8] sm:$0xff]
  %v16 = vld [vmem:[%s0 + $0x10] sm:$0xff]
  %v17 = vld [vmem:[%s0 + $0x18] sm:$0xff]
  %v18 = vld [vmem:[%s0 + $0x20] sm:$0xff]
  %v19 = vld [vmem:[%s0 + $0x28] sm:$0xff]
  %v20 = vld [vmem:[%s0 + $0x30] sm:$0xff]
  %v21 = vld [vmem:[%s0 + $0x38] sm:$0xff]
  %v22 = vld [vmem:[%s0 + $0x40] sm:$0xff]
  %v23 = vld [vmem:[%s0 + $0x48] sm:$0xff]
  %v24 = vld [vmem:[%s0 + $0x50] sm:$0xff]
  %v25 = vld [vmem:[%s0 + $0x58] sm:$0xff]
  %v26 = vld [vmem:[%s0 + $0x60] sm:$0xff]
  %v27 = vld [vmem:[%s0 + $0x68] sm:$0xff]
  %v28 = vld [vmem:[%s0 + $0x70] sm:$0xff]
  %v29 = vld [vmem:[%s0 + $0x78] sm:$0xff]
  %v30 = vld [vmem:[%s0 + $0x80] sm:$0xff]
  %v31 = vld [vmem:[%s0 + $0x88] sm:$0xff]
  %v32 = vld [vmem:[%s0 + $0x90] sm:$0xff]
  %v33 = vld [vmem:[%s0 + $0x98] sm:$0xff]
  %v34 = vld [vmem:[%s0 + $0xa0] sm:$0xff]
  %v35 = vld [vmem:[%s0 + $0xa8] sm:$0xff]
  %v36 = vld [vmem:[%s0 + $0xb0] sm:$0xff]
  %v37 = vld [vmem:[%s0 + $0xb8] sm:$0xff]
  %v38 = vld [vmem:[%s0 + $0xc0] sm:$0xff]
  %v39 = vld [vmem:[%s0 + $0xc8] sm:$0xff]
  %v40 = vld [vmem:[%s0 + $0xd0] sm:$0xff]
  %v41 = vld [vmem:[%s0 + $0xd8] sm:$0xff]
  %v42 = vld [vmem:[%s0 + $0xe0] sm:$0xff]
  %v43 = vld [vmem:[%s0 + $0xe8] sm:$0xff]
  %v44 = vld [vmem:[%s0 + $0xf0] sm:$0xff]
  %v45 = vld [vmem:[%s0 + $0xf8] sm:$0xff]
  %v46 = vld [vmem:[%s0 + $0x100] sm:$0xff]
  %v47 = vld [vmem:[%s0 + $0x108] sm:$0xff]
  %v48 = vld [vmem:[%s0 + $0x110] sm:$0xff]
  %v49 = vld [vmem:[%s0 + $0x118] sm:$0xff]
  %v50 = vld [vmem:[%s0 + $0x120] sm:$0xff]
  %v51 = vld [vmem:[%s0 + $0x128] sm:$0xff]
  %v52 = vld [vmem:[%s0 + $0x130] sm:$0xff]
  %v53 = vld [vmem:[%s0 + $0x138] sm:$0xff]
  %v54 = vld [vmem:[%s0 + $0x140] sm:$0xff]
  %v55 = vld [vmem:[%s0 + $0x148] sm:$0xff]
  %v56 = vld [vmem:[%s0 + $0x150] sm:$0xff]
  %v57 = vld [vmem:[%s0 + $0x158] sm:$0xff]
  %v58 = vld [vmem:[%s0 + $0x160] sm:$0xff]
  %v59 = vld [vmem:[%s0 + $0x168] sm:$0xff]
  %v60 = vld [vmem:[%s0 + $0x170] sm:$0xff]
  %v61 = vld [vmem:[%s0 + $0x178] sm:$0xff]
  %v62 = vld [vmem:[%s0 + $0x180] sm:$0xff]
  %v63 = vld [vmem:[%s0 + $0x188] sm:$0xff]
  %v64 = vld [vmem:[%s0 + $0x190] sm:$0xff]
  %v65 = vld [vmem:[%s0 + $0x198] sm:$0xff]
  %v66 = vld [vmem:[%s0 + $0x1a0] sm:$0xff]
  %v67 = vld [vmem:[%s0 + $0x1a8] sm:$0xff]
  %v68 = vld [vmem:[%s0 + $0x1b0] sm:$0xff]
  %v69 = vld [vmem:[%s0 + $0x1b8] sm:$0xff]
  %v70 = vld [vmem:[%s0 + $0x1c0] sm:$0xff]
  %v71 = vld [vmem:[%s0 + $0x1c8] sm:$0xff]
  %v72 = vld [vmem:[%s0 + $0x1d0] sm:$0xff]
  %v73 = vld [vmem:[%s0 + $0x1d8] sm:$0xff]
  %v74 = vld [vmem:[%s0 + $0x1e0] sm:$0xff]
  %v75 = vld [vmem:[%s0 + $0x1e8] sm:$0xff]
  %v76 = vld [vmem:[%s0 + $0x1f0] sm:$0xff]
  %v77 = vld [vmem:[%s0 + $0x1f8] sm:$0xff]
  %v78 = vld [vmem:[%s1] sm:$0xff]
  %v79 = vld [vmem:[%s1 + $0x8] sm:$0xff]
  %v80 = vld [vmem:[%s2] sm:$0x1]
  %v82 = vlaneseq
  %v83 = vshrl.u32 %v82, 7
  %v84 = vsub.s32 0, %v83
  %v85 = vrot.slane %v80, %v84
  %vm87 = vcmask 130048
  %v89 = vsel %vm87, %v14, 0
  %v92 = vsel %vm87, %v15, 0
  %v95 = vsel %vm87, %v16, 0
  %v98 = vsel %vm87, %v17, 0
  %v101 = vsel %vm87, %v18, 0
  %v104 = vsel %vm87, %v19, 0
  %v107 = vsel %vm87, %v20, 0
  %v110 = vsel %vm87, %v21, 0
  %v113 = vsel %vm87, %v22, 0
  %v116 = vsel %vm87, %v23, 0
  %v119 = vsel %vm87, %v24, 0
  %v122 = vsel %vm87, %v25, 0
  %v125 = vsel %vm87, %v26, 0
  %v128 = vsel %vm87, %v27, 0
  %v131 = vsel %vm87, %v28, 0
  %v134 = vsel %vm87, %v29, 0
  %v137 = vsel %vm87, %v30, 0
  %v140 = vsel %vm87, %v31, 0
  %v143 = vsel %vm87, %v32, 0
  %v146 = vsel %vm87, %v33, 0
  %v149 = vsel %vm87, %v34, 0
  %v152 = vsel %vm87, %v35, 0
  %v155 = vsel %vm87, %v36, 0
  %v158 = vsel %vm87, %v37, 0
  %v161 = vsel %vm87, %v38, 0
  %v164 = vsel %vm87, %v39, 0
  %v167 = vsel %vm87, %v40, 0
  %v170 = vsel %vm87, %v41, 0
  %v173 = vsel %vm87, %v42, 0
  %v176 = vsel %vm87, %v43, 0
  %v179 = vsel %vm87, %v44, 0
  %v182 = vsel %vm87, %v45, 0
  %v185 = vsel %vm87, %v46, 0
  %v188 = vsel %vm87, %v47, 0
  %v191 = vsel %vm87, %v48, 0
  %v194 = vsel %vm87, %v49, 0
  %v197 = vsel %vm87, %v50, 0
  %v200 = vsel %vm87, %v51, 0
  %v203 = vsel %vm87, %v52, 0
  %v206 = vsel %vm87, %v53, 0
  %v209 = vsel %vm87, %v54, 0
  %v212 = vsel %vm87, %v55, 0
  %v215 = vsel %vm87, %v56, 0
  %v218 = vsel %vm87, %v57, 0
  %v221 = vsel %vm87, %v58, 0
  %v224 = vsel %vm87, %v59, 0
  %v227 = vsel %vm87, %v60, 0
  %v230 = vsel %vm87, %v61, 0
  %v233 = vsel %vm87, %v62, 0
  %v236 = vsel %vm87, %v63, 0
  %v239 = vsel %vm87, %v64, 0
  %v242 = vsel %vm87, %v65, 0
  %v245 = vsel %vm87, %v66, 0
  %v248 = vsel %vm87, %v67, 0
  %v251 = vsel %vm87, %v68, 0
  %v254 = vsel %vm87, %v69, 0
  %v257 = vsel %vm87, %v70, 0
  %v260 = vsel %vm87, %v71, 0
  %v263 = vsel %vm87, %v72, 0
  %v266 = vsel %vm87, %v73, 0
  %v269 = vsel %vm87, %v74, 0
  %v272 = vsel %vm87, %v75, 0
  %v275 = vsel %vm87, %v76, 0
  %v278 = vsel %vm87, %v77, 0
  %280 = vmatprep.subr.mxu0 0.0
  %281 = vmatpush1.msra.mxu0 %v78
  %282 = vmatprep.subr.mxu0 0.0
  %283 = vmatpush1.msra.mxu0 %v79
  %284 = vmatprep.subr.mxu0 0.0
  %285 = vmatpush1.msra.mxu0 0.0
  %286 = vmatprep.subr.mxu0 0.0
  %287 = vmatpush1.msra.mxu0 0.0
  %288 = vmatprep.subr.mxu0 0.0
  %289 = vmatpush1.msra.mxu0 0.0
  %290 = vmatprep.subr.mxu0 0.0
  %291 = vmatpush1.msra.mxu0 0.0
  %292 = vmatprep.subr.mxu0 0.0
  %293 = vmatpush1.msra.mxu0 0.0
  %294 = vmatprep.subr.mxu0 0.0
  %295 = vmatpush1.msra.mxu0 0.0
  %296 = vmatprep.subr.mxu0 0.0
  %297 = vmatpush1.msra.mxu0 0.0
  %298 = vmatprep.subr.mxu0 0.0
  %299 = vmatpush1.msra.mxu0 0.0
  %300 = vmatprep.subr.mxu0 0.0
  %301 = vmatpush1.msra.mxu0 0.0
  %302 = vmatprep.subr.mxu0 0.0
  %303 = vmatpush1.msra.mxu0 0.0
  %304 = vmatprep.subr.mxu0 0.0
  %305 = vmatpush1.msra.mxu0 0.0
  %306 = vmatprep.subr.mxu0 0.0
  %307 = vmatpush1.msra.mxu0 0.0
  %308 = vmatprep.subr.mxu0 0.0
  %309 = vmatpush1.msra.mxu0 0.0
  %310 = vmatprep.subr.mxu0 0.0
  %311 = vmatpush1.msra.mxu0 0.0
  %312 = vmatprep.subr.mxu0 0.0
  %313 = vmatpush1.msra.mxu0 0.0
  %314 = vmatprep.subr.mxu0 0.0
  %315 = vmatpush1.msra.mxu0 0.0
  %316 = vmatprep.subr.mxu0 0.0
  %317 = vmatpush1.msra.mxu0 0.0
  %318 = vmatprep.subr.mxu0 0.0
  %319 = vmatpush1.msra.mxu0 0.0
  %320 = vmatprep.subr.mxu0 0.0
  %321 = vmatpush1.msra.mxu0 0.0
  %322 = vmatprep.subr.mxu0 0.0
  %323 = vmatpush1.msra.mxu0 0.0
  %324 = vmatprep.subr.mxu0 0.0
  %325 = vmatpush1.msra.mxu0 0.0
  %326 = vmatprep.subr.mxu0 0.0
  %327 = vmatpush1.msra.mxu0 0.0
  %328 = vmatprep.subr.mxu0 0.0
  %329 = vmatpush1.msra.mxu0 0.0
  %330 = vmatprep.subr.mxu0 0.0
  %331 = vmatpush1.msra.mxu0 0.0
  %332 = vmatprep.subr.mxu0 0.0
  %333 = vmatpush1.msra.mxu0 0.0
  %334 = vmatprep.subr.mxu0 0.0
  %335 = vmatpush1.msra.mxu0 0.0
  %336 = vmatprep.subr.mxu0 0.0
  %337 = vmatpush1.msra.mxu0 0.0
  %338 = vmatprep.subr.mxu0 0.0
  %339 = vmatpush1.msra.mxu0 0.0
  %340 = vmatprep.subr.mxu0 0.0
  %341 = vmatpush1.msra.mxu0 0.0
  %342 = vmatprep.subr.mxu0 0.0
  %343 = vmatpush1.msra.mxu0 0.0
  %344 = vmatprep.mubr.f32.mxu0 0.0
  %345 = vmatmul.mubr.f32.gmra.mrb[0].mxu0 %v89
  %v346 = vpop.f32.mrb[0].mxu0
  %v347 = vadd.f32 %v85, %v346
  %v348 = vpop.f32.mrb[0].mxu0
  %349 = vmatprep.mubr.f32.mxu0 0.0
  %350 = vmatmul.mubr.f32.gmra.mrb[0].mxu0 %v92
  %v351 = vpop.f32.mrb[0].mxu0
  %v352 = vadd.f32 %v85, %v351
  %v353 = vpop.f32.mrb[0].mxu0
  %354 = vmatprep.mubr.f32.mxu0 0.0
  %355 = vmatmul.mubr.f32.gmra.mrb[0].mxu0 %v95
  %v356 = vpop.f32.mrb[0].mxu0
  %v357 = vadd.f32 %v85, %v356
  %v358 = vpop.f32.mrb[0].mxu0
  %359 = vmatprep.mubr.f32.mxu0 0.0
  %360 = vmatmul.mubr.f32.gmra.mrb[0].mxu0 %v98
  %v361 = vpop.f32.mrb[0].mxu0
  %v362 = vadd.f32 %v85, %v361
  %v363 = vpop.f32.mrb[0].mxu0
  %364 = vmatprep.mubr.f32.mxu0 0.0
  %365 = vmatmul.mubr.f32.gmra.mrb[0].mxu0 %v101
  %v366 = vpop.f32.mrb[0].mxu0
  %v367 = vadd.f32 %v85, %v366
  %v368 = vpop.f32.mrb[0].mxu0
  %369 = vmatprep.mubr.f32.mxu0 0.0
  %370 = vmatmul.mubr.f32.gmra.mrb[0].mxu0 %v104
  %v371 = vpop.f32.mrb[0].mxu0
  %v372 = vadd.f32 %v85, %v371
  %v373 = vpop.f32.mrb[0].mxu0
  %374 = vmatprep.mubr.f32.mxu0 0.0
  %375 = vmatmul.mubr.f32.gmra.mrb[0].mxu0 %v107
  %v376 = vpop.f32.mrb[0].mxu0
  %v377 = vadd.f32 %v85, %v376
  %v378 = vpop.f32.mrb[0].mxu0
  %379 = vmatprep.mubr.f32.mxu0 0.0
  %380 = vmatmul.mubr.f32.gmra.mrb[0].mxu0 %v110
  %v381 = vpop.f32.mrb[0].mxu0
  %v382 = vadd.f32 %v85, %v381
  %v383 = vpop.f32.mrb[0].mxu0
  %384 = vmatprep.mubr.f32.mxu0 0.0
  %385 = vmatmul.mubr.f32.gmra.mrb[0].mxu0 %v113
  %v386 = vpop.f32.mrb[0].mxu0
  %v387 = vadd.f32 %v85, %v386
  %v388 = vpop.f32.mrb[0].mxu0
  %389 = vmatprep.mubr.f32.mxu0 0.0
  %390 = vmatmul.mubr.f32.gmra.mrb[0].mxu0 %v116
  %v391 = vpop.f32.mrb[0].mxu0
  %v392 = vadd.f32 %v85, %v391
  %v393 = vpop.f32.mrb[0].mxu0
  %394 = vmatprep.mubr.f32.mxu0 0.0
  %395 = vmatmul.mubr.f32.gmra.mrb[0].mxu0 %v119
  %v396 = vpop.f32.mrb[0].mxu0
  %v397 = vadd.f32 %v85, %v396
  %v398 = vpop.f32.mrb[0].mxu0
  %399 = vmatprep.mubr.f32.mxu0 0.0
  %400 = vmatmul.mubr.f32.gmra.mrb[0].mxu0 %v122
  %v401 = vpop.f32.mrb[0].mxu0
  %v402 = vadd.f32 %v85, %v401
  %v403 = vpop.f32.mrb[0].mxu0
  %404 = vmatprep.mubr.f32.mxu0 0.0
  %405 = vmatmul.mubr.f32.gmra.mrb[0].mxu0 %v125
  %v406 = vpop.f32.mrb[0].mxu0
  %v407 = vadd.f32 %v85, %v406
  %v408 = vpop.f32.mrb[0].mxu0
  %409 = vmatprep.mubr.f32.mxu0 0.0
  %410 = vmatmul.mubr.f32.gmra.mrb[0].mxu0 %v128
  %v411 = vpop.f32.mrb[0].mxu0
  %v412 = vadd.f32 %v85, %v411
  %v413 = vpop.f32.mrb[0].mxu0
  %414 = vmatprep.mubr.f32.mxu0 0.0
  %415 = vmatmul.mubr.f32.gmra.mrb[0].mxu0 %v131
  %v416 = vpop.f32.mrb[0].mxu0
  %v417 = vadd.f32 %v85, %v416
  %v418 = vpop.f32.mrb[0].mxu0
  %419 = vmatprep.mubr.f32.mxu0 0.0
  %420 = vmatmul.mubr.f32.gmra.mrb[0].mxu0 %v134
  %v421 = vpop.f32.mrb[0].mxu0
  %v422 = vadd.f32 %v85, %v421
  %v423 = vpop.f32.mrb[0].mxu0
  %424 = vmatprep.mubr.f32.mxu0 0.0
  %425 = vmatmul.mubr.f32.gmra.mrb[0].mxu0 %v137
  %v426 = vpop.f32.mrb[0].mxu0
  %v427 = vadd.f32 %v85, %v426
  %v428 = vpop.f32.mrb[0].mxu0
  %429 = vmatprep.mubr.f32.mxu0 0.0
  %430 = vmatmul.mubr.f32.gmra.mrb[0].mxu0 %v140
  %v431 = vpop.f32.mrb[0].mxu0
  %v432 = vadd.f32 %v85, %v431
  %v433 = vpop.f32.mrb[0].mxu0
  %434 = vmatprep.mubr.f32.mxu0 0.0
  %435 = vmatmul.mubr.f32.gmra.mrb[0].mxu0 %v143
  %v436 = vpop.f32.mrb[0].mxu0
  %v437 = vadd.f32 %v85, %v436
  %v438 = vpop.f32.mrb[0].mxu0
  %439 = vmatprep.mubr.f32.mxu0 0.0
  %440 = vmatmul.mubr.f32.gmra.mrb[0].mxu0 %v146
  %v441 = vpop.f32.mrb[0].mxu0
  %v442 = vadd.f32 %v85, %v441
  %v443 = vpop.f32.mrb[0].mxu0
  %444 = vmatprep.mubr.f32.mxu0 0.0
  %445 = vmatmul.mubr.f32.gmra.mrb[0].mxu0 %v149
  %v446 = vpop.f32.mrb[0].mxu0
  %v447 = vadd.f32 %v85, %v446
  %v448 = vpop.f32.mrb[0].mxu0
  %449 = vmatprep.mubr.f32.mxu0 0.0
  %450 = vmatmul.mubr.f32.gmra.mrb[0].mxu0 %v152
  %v451 = vpop.f32.mrb[0].mxu0
  %v452 = vadd.f32 %v85, %v451
  %v453 = vpop.f32.mrb[0].mxu0
  %454 = vmatprep.mubr.f32.mxu0 0.0
  %455 = vmatmul.mubr.f32.gmra.mrb[0].mxu0 %v155
  %v456 = vpop.f32.mrb[0].mxu0
  %v457 = vadd.f32 %v85, %v456
  %v458 = vpop.f32.mrb[0].mxu0
  %459 = vmatprep.mubr.f32.mxu0 0.0
  %460 = vmatmul.mubr.f32.gmra.mrb[0].mxu0 %v158
  %v461 = vpop.f32.mrb[0].mxu0
  %v462 = vadd.f32 %v85, %v461
  %v463 = vpop.f32.mrb[0].mxu0
  %464 = vmatprep.mubr.f32.mxu0 0.0
  %465 = vmatmul.mubr.f32.gmra.mrb[0].mxu0 %v161
  %v466 = vpop.f32.mrb[0].mxu0
  %v467 = vadd.f32 %v85, %v466
  %v468 = vpop.f32.mrb[0].mxu0
  %469 = vmatprep.mubr.f32.mxu0 0.0
  %470 = vmatmul.mubr.f32.gmra.mrb[0].mxu0 %v164
  %v471 = vpop.f32.mrb[0].mxu0
  %v472 = vadd.f32 %v85, %v471
  %v473 = vpop.f32.mrb[0].mxu0
  %474 = vmatprep.mubr.f32.mxu0 0.0
  %475 = vmatmul.mubr.f32.gmra.mrb[0].mxu0 %v167
  %v476 = vpop.f32.mrb[0].mxu0
  %v477 = vadd.f32 %v85, %v476
  %v478 = vpop.f32.mrb[0].mxu0
  %479 = vmatprep.mubr.f32.mxu0 0.0
  %480 = vmatmul.mubr.f32.gmra.mrb[0].mxu0 %v170
  %v481 = vpop.f32.mrb[0].mxu0
  %v482 = vadd.f32 %v85, %v481
  %v483 = vpop.f32.mrb[0].mxu0
  %484 = vmatprep.mubr.f32.mxu0 0.0
  %485 = vmatmul.mubr.f32.gmra.mrb[0].mxu0 %v173
  %v486 = vpop.f32.mrb[0].mxu0
  %v487 = vadd.f32 %v85, %v486
  %v488 = vpop.f32.mrb[0].mxu0
  %489 = vmatprep.mubr.f32.mxu0 0.0
  %490 = vmatmul.mubr.f32.gmra.mrb[0].mxu0 %v176
  %v491 = vpop.f32.mrb[0].mxu0
  %v492 = vadd.f32 %v85, %v491
  %v493 = vpop.f32.mrb[0].mxu0
  %494 = vmatprep.mubr.f32.mxu0 0.0
  %495 = vmatmul.mubr.f32.gmra.mrb[0].mxu0 %v179
  %v496 = vpop.f32.mrb[0].mxu0
  %v497 = vadd.f32 %v85, %v496
  %v498 = vpop.f32.mrb[0].mxu0
  %499 = vmatprep.mubr.f32.mxu0 0.0
  %500 = vmatmul.mubr.f32.gmra.mrb[0].mxu0 %v182
  %v501 = vpop.f32.mrb[0].mxu0
  %v502 = vadd.f32 %v85, %v501
  %v503 = vpop.f32.mrb[0].mxu0
  %504 = vmatprep.mubr.f32.mxu0 0.0
  %505 = vmatmul.mubr.f32.gmra.mrb[0].mxu0 %v185
  %v506 = vpop.f32.mrb[0].mxu0
  %v507 = vadd.f32 %v85, %v506
  %v508 = vpop.f32.mrb[0].mxu0
  %509 = vmatprep.mubr.f32.mxu0 0.0
  %510 = vmatmul.mubr.f32.gmra.mrb[0].mxu0 %v188
  %v511 = vpop.f32.mrb[0].mxu0
  %v512 = vadd.f32 %v85, %v511
  %v513 = vpop.f32.mrb[0].mxu0
  %514 = vmatprep.mubr.f32.mxu0 0.0
  %515 = vmatmul.mubr.f32.gmra.mrb[0].mxu0 %v191
  %v516 = vpop.f32.mrb[0].mxu0
  %v517 = vadd.f32 %v85, %v516
  %v518 = vpop.f32.mrb[0].mxu0
  %519 = vmatprep.mubr.f32.mxu0 0.0
  %520 = vmatmul.mubr.f32.gmra.mrb[0].mxu0 %v194
  %v521 = vpop.f32.mrb[0].mxu0
  %v522 = vadd.f32 %v85, %v521
  %v523 = vpop.f32.mrb[0].mxu0
  %524 = vmatprep.mubr.f32.mxu0 0.0
  %525 = vmatmul.mubr.f32.gmra.mrb[0].mxu0 %v197
  %v526 = vpop.f32.mrb[0].mxu0
  %v527 = vadd.f32 %v85, %v526
  %v528 = vpop.f32.mrb[0].mxu0
  %529 = vmatprep.mubr.f32.mxu0 0.0
  %530 = vmatmul.mubr.f32.gmra.mrb[0].mxu0 %v200
  %v531 = vpop.f32.mrb[0].mxu0
  %v532 = vadd.f32 %v85, %v531
  %v533 = vpop.f32.mrb[0].mxu0
  %534 = vmatprep.mubr.f32.mxu0 0.0
  %535 = vmatmul.mubr.f32.gmra.mrb[0].mxu0 %v203
  %v536 = vpop.f32.mrb[0].mxu0
  %v537 = vadd.f32 %v85, %v536
  %v538 = vpop.f32.mrb[0].mxu0
  %539 = vmatprep.mubr.f32.mxu0 0.0
  %540 = vmatmul.mubr.f32.gmra.mrb[0].mxu0 %v206
  %v541 = vpop.f32.mrb[0].mxu0
  %v542 = vadd.f32 %v85, %v541
  %v543 = vpop.f32.mrb[0].mxu0
  %544 = vmatprep.mubr.f32.mxu0 0.0
  %545 = vmatmul.mubr.f32.gmra.mrb[0].mxu0 %v209
  %v546 = vpop.f32.mrb[0].mxu0
  %v547 = vadd.f32 %v85, %v546
  %v548 = vpop.f32.mrb[0].mxu0
  %549 = vmatprep.mubr.f32.mxu0 0.0
  %550 = vmatmul.mubr.f32.gmra.mrb[0].mxu0 %v212
  %v551 = vpop.f32.mrb[0].mxu0
  %v552 = vadd.f32 %v85, %v551
  %v553 = vpop.f32.mrb[0].mxu0
  %554 = vmatprep.mubr.f32.mxu0 0.0
  %555 = vmatmul.mubr.f32.gmra.mrb[0].mxu0 %v215
  %v556 = vpop.f32.mrb[0].mxu0
  %v557 = vadd.f32 %v85, %v556
  %v558 = vpop.f32.mrb[0].mxu0
  %559 = vmatprep.mubr.f32.mxu0 0.0
  %560 = vmatmul.mubr.f32.gmra.mrb[0].mxu0 %v218
  %v561 = vpop.f32.mrb[0].mxu0
  %v562 = vadd.f32 %v85, %v561
  %v563 = vpop.f32.mrb[0].mxu0
  %564 = vmatprep.mubr.f32.mxu0 0.0
  %565 = vmatmul.mubr.f32.gmra.mrb[0].mxu0 %v221
  %v566 = vpop.f32.mrb[0].mxu0
  %v567 = vadd.f32 %v85, %v566
  %v568 = vpop.f32.mrb[0].mxu0
  %569 = vmatprep.mubr.f32.mxu0 0.0
  %570 = vmatmul.mubr.f32.gmra.mrb[0].mxu0 %v224
  %v571 = vpop.f32.mrb[0].mxu0
  %v572 = vadd.f32 %v85, %v571
  %v573 = vpop.f32.mrb[0].mxu0
  %574 = vmatprep.mubr.f32.mxu0 0.0
  %575 = vmatmul.mubr.f32.gmra.mrb[0].mxu0 %v227
  %v576 = vpop.f32.mrb[0].mxu0
  %v577 = vadd.f32 %v85, %v576
  %v578 = vpop.f32.mrb[0].mxu0
  %579 = vmatprep.mubr.f32.mxu0 0.0
  %580 = vmatmul.mubr.f32.gmra.mrb[0].mxu0 %v230
  %v581 = vpop.f32.mrb[0].mxu0
  %v582 = vadd.f32 %v85, %v581
  %v583 = vpop.f32.mrb[0].mxu0
  %584 = vmatprep.mubr.f32.mxu0 0.0
  %585 = vmatmul.mubr.f32.gmra.mrb[0].mxu0 %v233
  %v586 = vpop.f32.mrb[0].mxu0
  %v587 = vadd.f32 %v85, %v586
  %v588 = vpop.f32.mrb[0].mxu0
  %589 = vmatprep.mubr.f32.mxu0 0.0
  %590 = vmatmul.mubr.f32.gmra.mrb[0].mxu0 %v236
  %v591 = vpop.f32.mrb[0].mxu0
  %v592 = vadd.f32 %v85, %v591
  %v593 = vpop.f32.mrb[0].mxu0
  %594 = vmatprep.mubr.f32.mxu0 0.0
  %595 = vmatmul.mubr.f32.gmra.mrb[0].mxu0 %v239
  %v596 = vpop.f32.mrb[0].mxu0
  %v597 = vadd.f32 %v85, %v596
  %v598 = vpop.f32.mrb[0].mxu0
  %599 = vmatprep.mubr.f32.mxu0 0.0
  %600 = vmatmul.mubr.f32.gmra.mrb[0].mxu0 %v242
  %v601 = vpop.f32.mrb[0].mxu0
  %v602 = vadd.f32 %v85, %v601
  %v603 = vpop.f32.mrb[0].mxu0
  %604 = vmatprep.mubr.f32.mxu0 0.0
  %605 = vmatmul.mubr.f32.gmra.mrb[0].mxu0 %v245
  %v606 = vpop.f32.mrb[0].mxu0
  %v607 = vadd.f32 %v85, %v606
  %v608 = vpop.f32.mrb[0].mxu0
  %609 = vmatprep.mubr.f32.mxu0 0.0
  %610 = vmatmul.mubr.f32.gmra.mrb[0].mxu0 %v248
  %v611 = vpop.f32.mrb[0].mxu0
  %v612 = vadd.f32 %v85, %v611
  %v613 = vpop.f32.mrb[0].mxu0
  %614 = vmatprep.mubr.f32.mxu0 0.0
  %615 = vmatmul.mubr.f32.gmra.mrb[0].mxu0 %v251
  %v616 = vpop.f32.mrb[0].mxu0
  %v617 = vadd.f32 %v85, %v616
  %v618 = vpop.f32.mrb[0].mxu0
  %619 = vmatprep.mubr.f32.mxu0 0.0
  %620 = vmatmul.mubr.f32.gmra.mrb[0].mxu0 %v254
  %v621 = vpop.f32.mrb[0].mxu0
  %v622 = vadd.f32 %v85, %v621
  %v623 = vpop.f32.mrb[0].mxu0
  %624 = vmatprep.mubr.f32.mxu0 0.0
  %625 = vmatmul.mubr.f32.gmra.mrb[0].mxu0 %v257
  %v626 = vpop.f32.mrb[0].mxu0
  %v627 = vadd.f32 %v85, %v626
  %v628 = vpop.f32.mrb[0].mxu0
  %629 = vmatprep.mubr.f32.mxu0 0.0
  %630 = vmatmul.mubr.f32.gmra.mrb[0].mxu0 %v260
  %v631 = vpop.f32.mrb[0].mxu0
  %v632 = vadd.f32 %v85, %v631
  %v633 = vpop.f32.mrb[0].mxu0
  %634 = vmatprep.mubr.f32.mxu0 0.0
  %635 = vmatmul.mubr.f32.gmra.mrb[0].mxu0 %v263
  %v636 = vpop.f32.mrb[0].mxu0
  %v637 = vadd.f32 %v85, %v636
  %v638 = vpop.f32.mrb[0].mxu0
  %639 = vmatprep.mubr.f32.mxu0 0.0
  %640 = vmatmul.mubr.f32.gmra.mrb[0].mxu0 %v266
  %v641 = vpop.f32.mrb[0].mxu0
  %v642 = vadd.f32 %v85, %v641
  %v643 = vpop.f32.mrb[0].mxu0
  %644 = vmatprep.mubr.f32.mxu0 0.0
  %645 = vmatmul.mubr.f32.gmra.mrb[0].mxu0 %v269
  %v646 = vpop.f32.mrb[0].mxu0
  %v647 = vadd.f32 %v85, %v646
  %v648 = vpop.f32.mrb[0].mxu0
  %649 = vmatprep.mubr.f32.mxu0 0.0
  %650 = vmatmul.mubr.f32.gmra.mrb[0].mxu0 %v272
  %v651 = vpop.f32.mrb[0].mxu0
  %v652 = vadd.f32 %v85, %v651
  %v653 = vpop.f32.mrb[0].mxu0
  %654 = vmatprep.mubr.f32.mxu0 0.0
  %655 = vmatmul.mubr.f32.gmra.mrb[0].mxu0 %v275
  %v656 = vpop.f32.mrb[0].mxu0
  %v657 = vadd.f32 %v85, %v656
  %v658 = vpop.f32.mrb[0].mxu0
  %659 = vmatprep.mubr.f32.mxu0 0.0
  %660 = vmatmul.mubr.f32.gmra.mrb[0].mxu0 %v278
  %v661 = vpop.f32.mrb[0].mxu0
  %v662 = vadd.f32 %v85, %v661
  %v663 = vpop.f32.mrb[0].mxu0
  %664 = vdwg.mxu0
  %v665 = vmax.f32 %v347, 0.0
  %v666 = vmax.f32 %v352, 0.0
  %v667 = vmax.f32 %v357, 0.0
  %v668 = vmax.f32 %v362, 0.0
  %v669 = vmax.f32 %v367, 0.0
  %v670 = vmax.f32 %v372, 0.0
  %v671 = vmax.f32 %v377, 0.0
  %v672 = vmax.f32 %v382, 0.0
  %v673 = vmax.f32 %v387, 0.0
  %v674 = vmax.f32 %v392, 0.0
  %v675 = vmax.f32 %v397, 0.0
  %v676 = vmax.f32 %v402, 0.0
  %v677 = vmax.f32 %v407, 0.0
  %v678 = vmax.f32 %v412, 0.0
  %v679 = vmax.f32 %v417, 0.0
  %v680 = vmax.f32 %v422, 0.0
  %v681 = vmax.f32 %v427, 0.0
  %v682 = vmax.f32 %v432, 0.0
  %v683 = vmax.f32 %v437, 0.0
  %v684 = vmax.f32 %v442, 0.0
  %v685 = vmax.f32 %v447, 0.0
  %v686 = vmax.f32 %v452, 0.0
  %v687 = vmax.f32 %v457, 0.0
  %v688 = vmax.f32 %v462, 0.0
  %v689 = vmax.f32 %v467, 0.0
  %v690 = vmax.f32 %v472, 0.0
  %v691 = vmax.f32 %v477, 0.0
  %v692 = vmax.f32 %v482, 0.0
  %v693 = vmax.f32 %v487, 0.0
  %v694 = vmax.f32 %v492, 0.0
  %v695 = vmax.f32 %v497, 0.0
  %v696 = vmax.f32 %v502, 0.0
  %v697 = vmax.f32 %v507, 0.0
  %v698 = vmax.f32 %v512, 0.0
  %v699 = vmax.f32 %v517, 0.0
  %v700 = vmax.f32 %v522, 0.0
  %v701 = vmax.f32 %v527, 0.0
  %v702 = vmax.f32 %v532, 0.0
  %v703 = vmax.f32 %v537, 0.0
  %v704 = vmax.f32 %v542, 0.0
  %v705 = vmax.f32 %v547, 0.0
  %v706 = vmax.f32 %v552, 0.0
  %v707 = vmax.f32 %v557, 0.0
  %v708 = vmax.f32 %v562, 0.0
  %v709 = vmax.f32 %v567, 0.0
  %v710 = vmax.f32 %v572, 0.0
  %v711 = vmax.f32 %v577, 0.0
  %v712 = vmax.f32 %v582, 0.0
  %v713 = vmax.f32 %v587, 0.0
  %v714 = vmax.f32 %v592, 0.0
  %v715 = vmax.f32 %v597, 0.0
  %v716 = vmax.f32 %v602, 0.0
  %v717 = vmax.f32 %v607, 0.0
  %v718 = vmax.f32 %v612, 0.0
  %v719 = vmax.f32 %v617, 0.0
  %v720 = vmax.f32 %v622, 0.0
  %v721 = vmax.f32 %v627, 0.0
  %v722 = vmax.f32 %v632, 0.0
  %v723 = vmax.f32 %v637, 0.0
  %v724 = vmax.f32 %v642, 0.0
  %v725 = vmax.f32 %v647, 0.0
  %v726 = vmax.f32 %v652, 0.0
  %v727 = vmax.f32 %v657, 0.0
  %v728 = vmax.f32 %v662, 0.0
  %v729 = vpack.c.bf16 %v666, %v665
  %v730 = vpack.c.bf16 %v668, %v667
  %v731 = vpack.c.bf16 %v670, %v669
  %v732 = vpack.c.bf16 %v672, %v671
  %v733 = vpack.c.bf16 %v674, %v673
  %v734 = vpack.c.bf16 %v676, %v675
  %v735 = vpack.c.bf16 %v678, %v677
  %v736 = vpack.c.bf16 %v680, %v679
  %v737 = vpack.c.bf16 %v682, %v681
  %v738 = vpack.c.bf16 %v684, %v683
  %v739 = vpack.c.bf16 %v686, %v685
  %v740 = vpack.c.bf16 %v688, %v687
  %v741 = vpack.c.bf16 %v690, %v689
  %v742 = vpack.c.bf16 %v692, %v691
  %v743 = vpack.c.bf16 %v694, %v693
  %v744 = vpack.c.bf16 %v696, %v695
  %v745 = vpack.c.bf16 %v698, %v697
  %v746 = vpack.c.bf16 %v700, %v699
  %v747 = vpack.c.bf16 %v702, %v701
  %v748 = vpack.c.bf16 %v704, %v703
  %v749 = vpack.c.bf16 %v706, %v705
  %v750 = vpack.c.bf16 %v708, %v707
  %v751 = vpack.c.bf16 %v710, %v709
  %v752 = vpack.c.bf16 %v712, %v711
  %v753 = vpack.c.bf16 %v714, %v713
  %v754 = vpack.c.bf16 %v716, %v715
  %v755 = vpack.c.bf16 %v718, %v717
  %v756 = vpack.c.bf16 %v720, %v719
  %v757 = vpack.c.bf16 %v722, %v721
  %v758 = vpack.c.bf16 %v724, %v723
  %v759 = vpack.c.bf16 %v726, %v725
  %v760 = vpack.c.bf16 %v728, %v727
  %v793 = vunpack.c.l.b16 %v729
  %v794 = vunpack.c.h.b16 %v729
  %v795 = vunpack.c.l.b16 %v730
  %v796 = vunpack.c.h.b16 %v730
  %v797 = vunpack.c.l.b16 %v731
  %v798 = vunpack.c.h.b16 %v731
  %v799 = vunpack.c.l.b16 %v732
  %v800 = vunpack.c.h.b16 %v732
  %v801 = vunpack.c.l.b16 %v733
  %v802 = vunpack.c.h.b16 %v733
  %v803 = vunpack.c.l.b16 %v734
  %v804 = vunpack.c.h.b16 %v734
  %v805 = vunpack.c.l.b16 %v735
  %v806 = vunpack.c.h.b16 %v735
  %v807 = vunpack.c.l.b16 %v736
  %v808 = vunpack.c.h.b16 %v736
  %v809 = vunpack.c.l.b16 %v737
  %v810 = vunpack.c.h.b16 %v737
  %v811 = vunpack.c.l.b16 %v738
  %v812 = vunpack.c.h.b16 %v738
  %v813 = vunpack.c.l.b16 %v739
  %v814 = vunpack.c.h.b16 %v739
  %v815 = vunpack.c.l.b16 %v740
  %v816 = vunpack.c.h.b16 %v740
  %v817 = vunpack.c.l.b16 %v741
  %v818 = vunpack.c.h.b16 %v741
  %v819 = vunpack.c.l.b16 %v742
  %v820 = vunpack.c.h.b16 %v742
  %v821 = vunpack.c.l.b16 %v743
  %v822 = vunpack.c.h.b16 %v743
  %v823 = vunpack.c.l.b16 %v744
  %v824 = vunpack.c.h.b16 %v744
  %v825 = vunpack.c.l.b16 %v745
  %v826 = vunpack.c.h.b16 %v745
  %v827 = vunpack.c.l.b16 %v746
  %v828 = vunpack.c.h.b16 %v746
  %v829 = vunpack.c.l.b16 %v747
  %v830 = vunpack.c.h.b16 %v747
  %v831 = vunpack.c.l.b16 %v748
  %v832 = vunpack.c.h.b16 %v748
  %v833 = vunpack.c.l.b16 %v749
  %v834 = vunpack.c.h.b16 %v749
  %v835 = vunpack.c.l.b16 %v750
  %v836 = vunpack.c.h.b16 %v750
  %v837 = vunpack.c.l.b16 %v751
  %v838 = vunpack.c.h.b16 %v751
  %v839 = vunpack.c.l.b16 %v752
  %v840 = vunpack.c.h.b16 %v752
  %v841 = vunpack.c.l.b16 %v753
  %v842 = vunpack.c.h.b16 %v753
  %v843 = vunpack.c.l.b16 %v754
  %v844 = vunpack.c.h.b16 %v754
  %v845 = vunpack.c.l.b16 %v755
  %v846 = vunpack.c.h.b16 %v755
  %v847 = vunpack.c.l.b16 %v756
  %v848 = vunpack.c.h.b16 %v756
  %v849 = vunpack.c.l.b16 %v757
  %v850 = vunpack.c.h.b16 %v757
  %v851 = vunpack.c.l.b16 %v758
  %v852 = vunpack.c.h.b16 %v758
  %v853 = vunpack.c.l.b16 %v759
  %v854 = vunpack.c.h.b16 %v759
  %v855 = vunpack.c.l.b16 %v760
  %v856 = vunpack.c.h.b16 %v760
  %v857 = vpack.c.b16 %v793, %v793
  %v858 = vpack.c.b16 %v794, %v794
  %v859 = vpack.c.b16 %v795, %v795
  %v860 = vpack.c.b16 %v796, %v796
  %v861 = vpack.c.b16 %v797, %v797
  %v862 = vpack.c.b16 %v798, %v798
  %v863 = vpack.c.b16 %v799, %v799
  %v864 = vpack.c.b16 %v800, %v800
  %v865 = vpack.c.b16 %v801, %v801
  %v866 = vpack.c.b16 %v802, %v802
  %v867 = vpack.c.b16 %v803, %v803
  %v868 = vpack.c.b16 %v804, %v804
  %v869 = vpack.c.b16 %v805, %v805
  %v870 = vpack.c.b16 %v806, %v806
  %v871 = vpack.c.b16 %v807, %v807
  %v872 = vpack.c.b16 %v808, %v808
  %v873 = vpack.c.b16 %v809, %v809
  %v874 = vpack.c.b16 %v810, %v810
  %v875 = vpack.c.b16 %v811, %v811
  %v876 = vpack.c.b16 %v812, %v812
  %v877 = vpack.c.b16 %v813, %v813
  %v878 = vpack.c.b16 %v814, %v814
  %v879 = vpack.c.b16 %v815, %v815
  %v880 = vpack.c.b16 %v816, %v816
  %v881 = vpack.c.b16 %v817, %v817
  %v882 = vpack.c.b16 %v818, %v818
  %v883 = vpack.c.b16 %v819, %v819
  %v884 = vpack.c.b16 %v820, %v820
  %v885 = vpack.c.b16 %v821, %v821
  %v886 = vpack.c.b16 %v822, %v822
  %v887 = vpack.c.b16 %v823, %v823
  %v888 = vpack.c.b16 %v824, %v824
  %v889 = vpack.c.b16 %v825, %v825
  %v890 = vpack.c.b16 %v826, %v826
  %v891 = vpack.c.b16 %v827, %v827
  %v892 = vpack.c.b16 %v828, %v828
  %v893 = vpack.c.b16 %v829, %v829
  %v894 = vpack.c.b16 %v830, %v830
  %v895 = vpack.c.b16 %v831, %v831
  %v896 = vpack.c.b16 %v832, %v832
  %v897 = vpack.c.b16 %v833, %v833
  %v898 = vpack.c.b16 %v834, %v834
  %v899 = vpack.c.b16 %v835, %v835
  %v900 = vpack.c.b16 %v836, %v836
  %v901 = vpack.c.b16 %v837, %v837
  %v902 = vpack.c.b16 %v838, %v838
  %v903 = vpack.c.b16 %v839, %v839
  %v904 = vpack.c.b16 %v840, %v840
  %v905 = vpack.c.b16 %v841, %v841
  %v906 = vpack.c.b16 %v842, %v842
  %v907 = vpack.c.b16 %v843, %v843
  %v908 = vpack.c.b16 %v844, %v844
  %v909 = vpack.c.b16 %v845, %v845
  %v910 = vpack.c.b16 %v846, %v846
  %v911 = vpack.c.b16 %v847, %v847
  %v912 = vpack.c.b16 %v848, %v848
  %v913 = vpack.c.b16 %v849, %v849
  %v914 = vpack.c.b16 %v850, %v850
  %v915 = vpack.c.b16 %v851, %v851
  %v916 = vpack.c.b16 %v852, %v852
  %v917 = vpack.c.b16 %v853, %v853
  %v918 = vpack.c.b16 %v854, %v854
  %v919 = vpack.c.b16 %v855, %v855
  %v920 = vpack.c.b16 %v856, %v856
  %vm985 = vcmask 257024
  %986 = vst.msk [vmem:[%s3] sm:$0xf] %vm985, %v857
  %987 = vst.msk [vmem:[%s3 + $0x4] sm:$0xf] %vm985, %v858
  %988 = vst.msk [vmem:[%s3 + $0x8] sm:$0xf] %vm985, %v859
  %989 = vst.msk [vmem:[%s3 + $0xc] sm:$0xf] %vm985, %v860
  %990 = vst.msk [vmem:[%s3 + $0x10] sm:$0xf] %vm985, %v861
  %991 = vst.msk [vmem:[%s3 + $0x14] sm:$0xf] %vm985, %v862
  %992 = vst.msk [vmem:[%s3 + $0x18] sm:$0xf] %vm985, %v863
  %993 = vst.msk [vmem:[%s3 + $0x1c] sm:$0xf] %vm985, %v864
  %994 = vst.msk [vmem:[%s3 + $0x20] sm:$0xf] %vm985, %v865
  %995 = vst.msk [vmem:[%s3 + $0x24] sm:$0xf] %vm985, %v866
  %996 = vst.msk [vmem:[%s3 + $0x28] sm:$0xf] %vm985, %v867
  %997 = vst.msk [vmem:[%s3 + $0x2c] sm:$0xf] %vm985, %v868
  %998 = vst.msk [vmem:[%s3 + $0x30] sm:$0xf] %vm985, %v869
  %999 = vst.msk [vmem:[%s3 + $0x34] sm:$0xf] %vm985, %v870
  %1000 = vst.msk [vmem:[%s3 + $0x38] sm:$0xf] %vm985, %v871
  %1001 = vst.msk [vmem:[%s3 + $0x3c] sm:$0xf] %vm985, %v872
  %1002 = vst.msk [vmem:[%s3 + $0x40] sm:$0xf] %vm985, %v873
  %1003 = vst.msk [vmem:[%s3 + $0x44] sm:$0xf] %vm985, %v874
  %1004 = vst.msk [vmem:[%s3 + $0x48] sm:$0xf] %vm985, %v875
  %1005 = vst.msk [vmem:[%s3 + $0x4c] sm:$0xf] %vm985, %v876
  %1006 = vst.msk [vmem:[%s3 + $0x50] sm:$0xf] %vm985, %v877
  %1007 = vst.msk [vmem:[%s3 + $0x54] sm:$0xf] %vm985, %v878
  %1008 = vst.msk [vmem:[%s3 + $0x58] sm:$0xf] %vm985, %v879
  %1009 = vst.msk [vmem:[%s3 + $0x5c] sm:$0xf] %vm985, %v880
  %1010 = vst.msk [vmem:[%s3 + $0x60] sm:$0xf] %vm985, %v881
  %1011 = vst.msk [vmem:[%s3 + $0x64] sm:$0xf] %vm985, %v882
  %1012 = vst.msk [vmem:[%s3 + $0x68] sm:$0xf] %vm985, %v883
  %1013 = vst.msk [vmem:[%s3 + $0x6c] sm:$0xf] %vm985, %v884
  %1014 = vst.msk [vmem:[%s3 + $0x70] sm:$0xf] %vm985, %v885
  %1015 = vst.msk [vmem:[%s3 + $0x74] sm:$0xf] %vm985, %v886
  %1016 = vst.msk [vmem:[%s3 + $0x78] sm:$0xf] %vm985, %v887
  %1017 = vst.msk [vmem:[%s3 + $0x7c] sm:$0xf] %vm985, %v888
  %1018 = vst.msk [vmem:[%s3 + $0x80] sm:$0xf] %vm985, %v889
  %1019 = vst.msk [vmem:[%s3 + $0x84] sm:$0xf] %vm985, %v890
  %1020 = vst.msk [vmem:[%s3 + $0x88] sm:$0xf] %vm985, %v891
  %1021 = vst.msk [vmem:[%s3 + $0x8c] sm:$0xf] %vm985, %v892
  %1022 = vst.msk [vmem:[%s3 + $0x90] sm:$0xf] %vm985, %v893
  %1023 = vst.msk [vmem:[%s3 + $0x94] sm:$0xf] %vm985, %v894
  %1024 = vst.msk [vmem:[%s3 + $0x98] sm:$0xf] %vm985, %v895
  %1025 = vst.msk [vmem:[%s3 + $0x9c] sm:$0xf] %vm985, %v896
  %1026 = vst.msk [vmem:[%s3 + $0xa0] sm:$0xf] %vm985, %v897
  %1027 = vst.msk [vmem:[%s3 + $0xa4] sm:$0xf] %vm985, %v898
  %1028 = vst.msk [vmem:[%s3 + $0xa8] sm:$0xf] %vm985, %v899
  %1029 = vst.msk [vmem:[%s3 + $0xac] sm:$0xf] %vm985, %v900
  %1030 = vst.msk [vmem:[%s3 + $0xb0] sm:$0xf] %vm985, %v901
  %1031 = vst.msk [vmem:[%s3 + $0xb4] sm:$0xf] %vm985, %v902
  %1032 = vst.msk [vmem:[%s3 + $0xb8] sm:$0xf] %vm985, %v903
  %1033 = vst.msk [vmem:[%s3 + $0xbc] sm:$0xf] %vm985, %v904
  %1034 = vst.msk [vmem:[%s3 + $0xc0] sm:$0xf] %vm985, %v905
  %1035 = vst.msk [vmem:[%s3 + $0xc4] sm:$0xf] %vm985, %v906
  %1036 = vst.msk [vmem:[%s3 + $0xc8] sm:$0xf] %vm985, %v907
  %1037 = vst.msk [vmem:[%s3 + $0xcc] sm:$0xf] %vm985, %v908
  %1038 = vst.msk [vmem:[%s3 + $0xd0] sm:$0xf] %vm985, %v909
  %1039 = vst.msk [vmem:[%s3 + $0xd4] sm:$0xf] %vm985, %v910
  %1040 = vst.msk [vmem:[%s3 + $0xd8] sm:$0xf] %vm985, %v911
  %1041 = vst.msk [vmem:[%s3 + $0xdc] sm:$0xf] %vm985, %v912
  %1042 = vst.msk [vmem:[%s3 + $0xe0] sm:$0xf] %vm985, %v913
  %1043 = vst.msk [vmem:[%s3 + $0xe4] sm:$0xf] %vm985, %v914
  %1044 = vst.msk [vmem:[%s3 + $0xe8] sm:$0xf] %vm985, %v915
  %1045 = vst.msk [vmem:[%s3 + $0xec] sm:$0xf] %vm985, %v916
  %1046 = vst.msk [vmem:[%s3 + $0xf0] sm:$0xf] %vm985, %v917
  %1047 = vst.msk [vmem:[%s3 + $0xf4] sm:$0xf] %vm985, %v918
  %1048 = vst.msk [vmem:[%s3 + $0xf8] sm:$0xf] %vm985, %v919
  %1049 = vst.msk [vmem:[%s3 + $0xfc] sm:$0xf] %vm985, %v920
  // Predicated region
  $region14: #{tpu_custom_call.1} parent=0 // pred_check
    _
  $region15: #{tpu_custom_call.1} parent=0 // pred_check_branch
    %1051 = sbr.rel (0) target = $region17
  $region16: #{tpu_custom_call.1} parent=0 // pred_region
    _
  $region17: #{tpu_custom_call.1} parent=0 // pred_fallthru
    _
  // Predicated region
  $region18: #{tpu_custom_call.1} parent=0 // pred_check
    _
  $region19: #{tpu_custom_call.1} parent=0 // pred_check_branch
    %1053 = sbr.rel (0) target = $region21
  $region20: #{tpu_custom_call.1} parent=0 // pred_region
    _
  $region21: #{tpu_custom_call.1} parent=0 // pred_fallthru
    _

</llo_original>
